<compile_context>
chip_gen: v6e
topology: v6e:2x2x1
jax: 0.10.0
libtpu: 0.0.40
codegen_flags: <defaults>
</compile_context>

<pallas_src>
import jax
import jax.numpy as jnp
from jax.experimental import pallas as pl
from jax.experimental.pallas import tpu as pltpu

KH = KW = 3  # Conv2d kernel size; padding=1, stride=1 -> "same" output


def _qat_conv_kernel(qp_ref, x_ref, w_ref, ws_ref, out_ref):
    """Fused fake-quant(act) -> fake-quant(w) -> conv (im2col matmul) -> fake-quant(out).

    qp_ref : SMEM (6,)   f32  [x_scale, 1/x_scale, x_zp, o_scale, 1/o_scale, o_zp]
    x_ref  : VMEM (N*H, W*KH*KW*Cin) f32  im2col'd activations (lane-dense)
    w_ref  : VMEM (W*KH*KW*Cin, W*Cout) f32  block-diagonal weight matrix
    ws_ref : VMEM (1, W*Cout) f32  per-output-channel weight scales (tiled over W)
    out_ref: VMEM (N*H, W*Cout) f32  lane-dense output slab
    """
    xs, inv_xs, xz = qp_ref[0], qp_ref[1], qp_ref[2]
    osc, inv_os, ozp = qp_ref[3], qp_ref[4], qp_ref[5]

    # ---- fake-quantize input activations (per-tensor affine quint8 [0,255]);
    # keep the zero-point-removed integer values (exactly representable in bf16).
    x = x_ref[...]
    q_x = jnp.clip(jnp.round(x * inv_xs) + xz, 0.0, 255.0) - xz

    # ---- fake-quantize weights (per-out-channel symmetric qint8 [-128,127]);
    # integer-valued.  Zero (off-diagonal) blocks quantize to exactly zero.
    # True divide (not reciprocal-mul) to bit-match round(w / scale) semantics.
    w = w_ref[...]
    ws = ws_ref[...]
    q_w = jnp.clip(jnp.round(w / ws), -128.0, 127.0)

    # ---- 3x3 conv as ONE im2col matmul on the MXU.  Integer-valued bf16
    # operands are exact and the f32 accumulation (max |acc| ~ 36*255*128 < 2^24)
    # is exact, so this bit-matches the f32 fake-quant formulation while using
    # the fast MXU path on v5e/v6e/v7x alike.
    acc = jnp.dot(q_x.astype(jnp.bfloat16), q_w.astype(jnp.bfloat16),
                  preferred_element_type=jnp.float32)      # (N*H, W*Cout) ints

    # ---- undo quantization scales (x_scale * per-channel w_scale) ...
    y = acc * (xs * ws)
    # ---- ... and fake-quantize the output activation (per-tensor affine quint8).
    out_ref[...] = (jnp.clip(jnp.round(y * inv_os) + ozp, 0.0, 255.0) - ozp) * osc


@jax.jit
def quant_fx_forward(x_nchw, weight_oihw, x_scale, x_zp, w_scale, o_scale, o_zp):
    """QAT fake-quant conv forward. x_nchw: (N, Cin, H, W); weight: (Cout, Cin, 3, 3)."""
    N, Cin, H, W = x_nchw.shape
    Cout = weight_oihw.shape[0]

    xs = jnp.asarray(x_scale, jnp.float32)
    xz = jnp.asarray(x_zp, jnp.float32)
    osc = jnp.asarray(o_scale, jnp.float32)
    ozp = jnp.asarray(o_zp, jnp.float32)
    wsc = jnp.asarray(w_scale, jnp.float32).reshape(Cout)

    # ---- layout plumbing (pure data movement, fused by XLA under jit) ------
    # NCHW -> NHWC, zero-pad spatially by 1 (padding=1 conv).  Padded zeros
    # fake-quantize to exactly zero, matching "SAME" conv on fake-quant input.
    x_nhwc = jnp.transpose(x_nchw, (0, 2, 3, 1)).astype(jnp.float32)
    xp = jnp.pad(x_nhwc, ((0, 0), (1, 1), (1, 1), (0, 0)))
    # im2col: feature index f = (kh*KW + kw)*Cin + ci
    taps = [xp[:, kh:kh + H, kw:kw + W, :] for kh in range(KH) for kw in range(KW)]
    patches = jnp.concatenate(taps, axis=-1)               # (N, H, W, KH*KW*Cin)
    lhs = patches.reshape(N * H, W * KH * KW * Cin)        # lane-dense LHS

    # Weight OIHW -> (KH*KW*Cin, Cout), then block-diagonal over the W axis so a
    # single matmul directly emits the lane-dense (N*H, W*Cout) output slab
    # (W*Cout = 128 here -> unmasked full-lane stores, no in-kernel reshape).
    w_mat = jnp.transpose(weight_oihw, (2, 3, 1, 0)).astype(jnp.float32)
    w_mat = w_mat.reshape(KH * KW * Cin, Cout)
    w_blk = jnp.kron(jnp.eye(W, dtype=jnp.float32), w_mat)  # (W*9*Cin, W*Cout)

    ws_tiled = jnp.tile(wsc, W).reshape(1, W * Cout)         # per-column w scales

    # Per-tensor qparams (and their exact reciprocals) go to SMEM: scalar reads,
    # no padded (8,128) VMEM tiles / extra DMAs just to fetch one float.
    qparams = jnp.stack([xs, 1.0 / xs, xz, osc, 1.0 / osc, ozp])

    out2d = pl.pallas_call(
        _qat_conv_kernel,
        out_shape=jax.ShapeDtypeStruct((N * H, W * Cout), jnp.float32),
        in_specs=[
            pl.BlockSpec(memory_space=pltpu.MemorySpace.SMEM),   # qparams
            pl.BlockSpec(memory_space=pltpu.MemorySpace.VMEM),   # im2col LHS
            pl.BlockSpec(memory_space=pltpu.MemorySpace.VMEM),   # block-diag weights
            pl.BlockSpec(memory_space=pltpu.MemorySpace.VMEM),   # weight scales
        ],
        out_specs=pl.BlockSpec(memory_space=pltpu.MemorySpace.VMEM),
    )(qparams, lhs, w_blk, ws_tiled)

    # lane-dense slab -> NHWC -> NCHW (PyTorch convention)
    out_nhwc = out2d.reshape(N, H, W, Cout)
    return jnp.transpose(out_nhwc, (0, 3, 1, 2))


# ---------------- observer "calibration" glue (plain JAX) ----------------
def _affine_qparams_uint8(t):
    """MinMax observer, per-tensor affine quint8 (quant_min=0, quant_max=255)."""
    t_min = jnp.minimum(jnp.min(t), 0.0)
    t_max = jnp.maximum(jnp.max(t), 0.0)
    scale = jnp.maximum((t_max - t_min) / 255.0, 1e-8)
    zp = jnp.clip(jnp.round(-t_min / scale), 0.0, 255.0)
    return scale.astype(jnp.float32), zp.astype(jnp.float32)


def _symmetric_qparams_int8_per_channel(w):
    """MinMax observer, per-out-channel symmetric qint8 (quant_min=-128, quant_max=127)."""
    max_abs = jnp.max(jnp.abs(w), axis=(1, 2, 3))
    return jnp.maximum(max_abs / 127.5, 1e-8).astype(jnp.float32)


def _fake_quant_affine(x, scale, zp):
    inv = 1.0 / scale
    return (jnp.clip(jnp.round(x * inv) + zp, 0.0, 255.0) - zp) * scale


def _qat_conv_reference(x_nchw, w_oihw, x_scale, x_zp, w_scale):
    """Plain-JAX fake-quant conv reference (integer-domain evaluation; exact)."""
    q_x = jnp.clip(jnp.round(x_nchw * (1.0 / x_scale)) + x_zp, 0.0, 255.0) - x_zp
    ws = w_scale.reshape(-1, 1, 1, 1)
    q_w = jnp.clip(jnp.round(w_oihw / ws), -128.0, 127.0)
    y_int = jax.lax.conv_general_dilated(
        q_x, q_w, window_strides=(1, 1), padding="SAME",
        dimension_numbers=("NCHW", "OIHW", "NCHW"))
    return y_int * (x_scale * w_scale.reshape(1, -1, 1, 1))


if __name__ == "__main__":
    key = jax.random.PRNGKey(0)
    k_x, k_w = jax.random.split(key)

    N, Cin, H, W = 2, 4, 16, 16
    Cout = 8

    x = jax.random.normal(k_x, (N, Cin, H, W), jnp.float32)
    weight = 0.1 * jax.random.normal(k_w, (Cout, Cin, KH, KW), jnp.float32)

    # activation observer (per-tensor affine quint8)
    x_scale, x_zp = _affine_qparams_uint8(x)
    # weight observer (per-output-channel symmetric qint8)
    w_scale = _symmetric_qparams_int8_per_channel(weight)
    # output observer calibrated on the (pre-output-quant) fake-quant conv output
    y_cal = _qat_conv_reference(x, weight, x_scale, x_zp, w_scale)
    o_scale, o_zp = _affine_qparams_uint8(y_cal)

    out = quant_fx_forward(x, weight, x_scale, x_zp, w_scale, o_scale, o_zp)
    out = jax.block_until_ready(out)

    # cross-check against the plain-JAX QAT reference
    ref = _fake_quant_affine(y_cal, o_scale, o_zp)
    assert out.shape == (N, Cout, H, W)
    err = float(jnp.max(jnp.abs(out - ref)))
    assert err < 1e-3, f"mismatch vs reference: max abs err = {err}"

    # TODO(synk): train/freeze/unfreeze/convert/export and observer running-min/max
    # state mutation of QuantFxBaseModule are host-side FX graph rewrites with no
    # Pallas equivalent; calibration is done above in plain JAX.
    print("KERNEL_OK")
</pallas_src>

<mosaic_0001>
module attributes {stable_mosaic.version = 11 : i64} {
  func.func @_qat_conv_kernel(%arg0: memref<6xf32, #tpu.memory_space<smem>>, %arg1: memref<32x576xf32, #tpu.memory_space<vmem>>, %arg2: memref<576x128xf32, #tpu.memory_space<vmem>>, %arg3: memref<1x128xf32, #tpu.memory_space<vmem>>, %arg4: memref<32x128xf32, #tpu.memory_space<vmem>>) attributes {dimension_semantics = [], scalar_prefetch = 0 : i64, scratch_operands = 0 : i64, tpu.core_type = #tpu.core_type<tc>} {
    %c0 = arith.constant 0 : index
    %0 = memref.load %arg0[%c0] : memref<6xf32, #tpu.memory_space<smem>>
    %c1 = arith.constant 1 : index
    %1 = memref.load %arg0[%c1] : memref<6xf32, #tpu.memory_space<smem>>
    %c2 = arith.constant 2 : index
    %2 = memref.load %arg0[%c2] : memref<6xf32, #tpu.memory_space<smem>>
    %c3 = arith.constant 3 : index
    %3 = memref.load %arg0[%c3] : memref<6xf32, #tpu.memory_space<smem>>
    %c4 = arith.constant 4 : index
    %4 = memref.load %arg0[%c4] : memref<6xf32, #tpu.memory_space<smem>>
    %c5 = arith.constant 5 : index
    %5 = memref.load %arg0[%c5] : memref<6xf32, #tpu.memory_space<smem>>
    %c0_0 = arith.constant 0 : index
    %c0_1 = arith.constant 0 : index
    %6 = vector.load %arg1[%c0_0, %c0_1] : memref<32x576xf32, #tpu.memory_space<vmem>>, vector<32x576xf32>
    %7 = vector.broadcast %1 : f32 to vector<32x576xf32>
    %8 = arith.mulf %6, %7 : vector<32x576xf32>
    %9 = math.roundeven %8 : vector<32x576xf32>
    %10 = vector.broadcast %2 : f32 to vector<32x576xf32>
    %11 = arith.addf %9, %10 : vector<32x576xf32>
    %cst = arith.constant 0.000000e+00 : f32
    %cst_2 = arith.constant 2.550000e+02 : f32
    %12 = vector.broadcast %cst : f32 to vector<32x576xf32>
    %13 = arith.maximumf %12, %11 : vector<32x576xf32>
    %14 = vector.broadcast %cst_2 : f32 to vector<32x576xf32>
    %15 = arith.minimumf %14, %13 : vector<32x576xf32>
    %16 = vector.broadcast %2 : f32 to vector<32x576xf32>
    %17 = arith.subf %15, %16 : vector<32x576xf32>
    %c0_3 = arith.constant 0 : index
    %c0_4 = arith.constant 0 : index
    %18 = vector.load %arg2[%c0_3, %c0_4] : memref<576x128xf32, #tpu.memory_space<vmem>>, vector<576x128xf32>
    %c0_5 = arith.constant 0 : index
    %c0_6 = arith.constant 0 : index
    %19 = vector.load %arg3[%c0_5, %c0_6] : memref<1x128xf32, #tpu.memory_space<vmem>>, vector<1x128xf32>
    %20 = vector.broadcast %19 : vector<1x128xf32> to vector<576x128xf32>
    %21 = arith.divf %18, %20 : vector<576x128xf32>
    %22 = math.roundeven %21 : vector<576x128xf32>
    %cst_7 = arith.constant -1.280000e+02 : f32
    %cst_8 = arith.constant 1.270000e+02 : f32
    %23 = vector.broadcast %cst_7 : f32 to vector<576x128xf32>
    %24 = arith.maximumf %23, %22 : vector<576x128xf32>
    %25 = vector.broadcast %cst_8 : f32 to vector<576x128xf32>
    %26 = arith.minimumf %25, %24 : vector<576x128xf32>
    %27 = arith.truncf %17 : vector<32x576xf32> to vector<32x576xbf16>
    %28 = arith.truncf %26 : vector<576x128xf32> to vector<576x128xbf16>
    %cst_9 = arith.constant dense<0.000000e+00> : vector<32x128xf32>
    %29 = tpu.matmul %27, %28, %cst_9 {dimension_numbers = #tpu.dot_dimension_numbers<[1], [0], [0], [1], [0, 0, 1, 1], [], []>} : vector<32x576xbf16>, vector<576x128xbf16>, vector<32x128xf32> -> vector<32x128xf32>
    %30 = vector.broadcast %0 : f32 to vector<1x128xf32>
    %31 = arith.mulf %30, %19 : vector<1x128xf32>
    %32 = vector.broadcast %31 : vector<1x128xf32> to vector<32x128xf32>
    %33 = arith.mulf %29, %32 : vector<32x128xf32>
    %34 = vector.broadcast %4 : f32 to vector<32x128xf32>
    %35 = arith.mulf %33, %34 : vector<32x128xf32>
    %36 = math.roundeven %35 : vector<32x128xf32>
    %37 = vector.broadcast %5 : f32 to vector<32x128xf32>
    %38 = arith.addf %36, %37 : vector<32x128xf32>
    %cst_10 = arith.constant 0.000000e+00 : f32
    %cst_11 = arith.constant 2.550000e+02 : f32
    %39 = vector.broadcast %cst_10 : f32 to vector<32x128xf32>
    %40 = arith.maximumf %39, %38 : vector<32x128xf32>
    %41 = vector.broadcast %cst_11 : f32 to vector<32x128xf32>
    %42 = arith.minimumf %41, %40 : vector<32x128xf32>
    %43 = vector.broadcast %5 : f32 to vector<32x128xf32>
    %44 = arith.subf %42, %43 : vector<32x128xf32>
    %45 = vector.broadcast %3 : f32 to vector<32x128xf32>
    %46 = arith.mulf %44, %45 : vector<32x128xf32>
    %c0_12 = arith.constant 0 : index
    %c0_13 = arith.constant 0 : index
    %47 = vector.load %arg4[%c0_12, %c0_13] : memref<32x128xf32, #tpu.memory_space<vmem>>, vector<32x128xf32>
    tpu.vector_store %arg4[%c0_12, %c0_13], %46 {strides = array<i32>} : memref<32x128xf32, #tpu.memory_space<vmem>>, vector<32x128xf32>,
    return
  }
}

</mosaic_0001>

<llo_original>
// kernel: mul.4
$region0: #{mul.4}
  %s0 = inlined_call_operand.vmem [shape: f32[3,3,4,8], index: 0, kind: input, shape index: {}]
  %s1 = inlined_call_operand.vmem [shape: f32[36,8], index: 1, kind: output, shape index: {}]
  $region1: #{mul.4} parent=0
    #allocation0 [shape = 'u8[36864]{0}', space=vmem, size = 0x9000, scoped, tag = 'scoped mem for input reshape']
    %s3 = sshll.u32 1, 4
    %s4 = ssub.s32 %s3, 1
    %s5 = smul.addr 4, 8
    %s6 = scalar_lea.vmem %s0, %s5
    %v7 = vld [vmem:[%s6] sm:%s4]
    %s8 = scalar_lea.vmem [#allocation0], 64
    %9 = vst [vmem:[%s8] sm:%s4] %v7
    %s10 = smul.addr 4, 7
    %s11 = scalar_lea.vmem %s0, %s10
    %v12 = vld [vmem:[%s11] sm:%s4]
    %s13 = scalar_lea.vmem [#allocation0], 56
    %14 = vst [vmem:[%s13] sm:%s4] %v12
    %s15 = smul.addr 4, 6
    %s16 = scalar_lea.vmem %s0, %s15
    %v17 = vld [vmem:[%s16] sm:%s4]
    %s18 = scalar_lea.vmem [#allocation0], 48
    %19 = vst [vmem:[%s18] sm:%s4] %v17
    %s20 = smul.addr 4, 5
    %s21 = scalar_lea.vmem %s0, %s20
    %v22 = vld [vmem:[%s21] sm:%s4]
    %s23 = scalar_lea.vmem [#allocation0], 40
    %24 = vst [vmem:[%s23] sm:%s4] %v22
    %s25 = smul.addr 4, 4
    %s26 = scalar_lea.vmem %s0, %s25
    %v27 = vld [vmem:[%s26] sm:%s4]
    %s28 = scalar_lea.vmem [#allocation0], 32
    %29 = vst [vmem:[%s28] sm:%s4] %v27
    %s30 = smul.addr 4, 3
    %s31 = scalar_lea.vmem %s0, %s30
    %v32 = vld [vmem:[%s31] sm:%s4]
    %s33 = scalar_lea.vmem [#allocation0], 24
    %34 = vst [vmem:[%s33] sm:%s4] %v32
    %s35 = smul.addr 4, 2
    %s36 = scalar_lea.vmem %s0, %s35
    %v37 = vld [vmem:[%s36] sm:%s4]
    %s38 = scalar_lea.vmem [#allocation0], 16
    %39 = vst [vmem:[%s38] sm:%s4] %v37
    %s40 = scalar_lea.vmem %s0, 4
    %v41 = vld [vmem:[%s40] sm:%s4]
    %s42 = scalar_lea.vmem [#allocation0], 8
    %43 = vst [vmem:[%s42] sm:%s4] %v41
    %v44 = vld [vmem:[%s0] sm:%s4]
    %45 = vst [vmem:[#allocation0] sm:%s4] %v44
    %v46 = vld [vmem:[#allocation0] sm:$0xf]
    %vm47 = vcmask 64512
    %48 = vst.msk [vmem:[%s1] sm:$0xf] %vm47, %v46
    %s49 = scalar_lea.vmem [#allocation0], 8
    %v50 = vld [vmem:[%s49] sm:$0xf]
    %vm51 = vcmask 64512
    %s52 = scalar_lea.vmem %s1, 4
    %53 = vst.msk [vmem:[%s52] sm:$0xf] %vm51, %v50
    %s54 = scalar_lea.vmem [#allocation0], 16
    %v55 = vld [vmem:[%s54] sm:$0xf]
    %vm56 = vcmask 64512
    %s57 = scalar_lea.vmem %s1, 8
    %58 = vst.msk [vmem:[%s57] sm:$0xf] %vm56, %v55
    %s59 = scalar_lea.vmem [#allocation0], 24
    %v60 = vld [vmem:[%s59] sm:$0xf]
    %vm61 = vcmask 64512
    %s62 = scalar_lea.vmem %s1, 12
    %63 = vst.msk [vmem:[%s62] sm:$0xf] %vm61, %v60
    %s64 = scalar_lea.vmem [#allocation0], 32
    %v65 = vld [vmem:[%s64] sm:$0xf]
    %vm66 = vcmask 64512
    %s67 = scalar_lea.vmem %s1, 16
    %68 = vst.msk [vmem:[%s67] sm:$0xf] %vm66, %v65
    %s69 = scalar_lea.vmem [#allocation0], 40
    %v70 = vld [vmem:[%s69] sm:$0xf]
    %vm71 = vcmask 64512
    %s72 = scalar_lea.vmem %s1, 20
    %73 = vst.msk [vmem:[%s72] sm:$0xf] %vm71, %v70
    %s74 = scalar_lea.vmem [#allocation0], 48
    %v75 = vld [vmem:[%s74] sm:$0xf]
    %vm76 = vcmask 64512
    %s77 = scalar_lea.vmem %s1, 24
    %78 = vst.msk [vmem:[%s77] sm:$0xf] %vm76, %v75
    %s79 = scalar_lea.vmem [#allocation0], 56
    %v80 = vld [vmem:[%s79] sm:$0xf]
    %vm81 = vcmask 64512
    %s82 = scalar_lea.vmem %s1, 28
    %83 = vst.msk [vmem:[%s82] sm:$0xf] %vm81, %v80
    %s84 = scalar_lea.vmem [#allocation0], 64
    %v85 = vld [vmem:[%s84] sm:$0xf]
    %vm86 = vcmask 64512
    %s87 = scalar_lea.vmem %s1, 32
    %88 = vst.msk [vmem:[%s87] sm:$0xf] %vm86, %v85

// kernel: tile.8
$region0: #{tile.8}
  #allocation0 [shape = 's32[1]{0}', space=sflag, size = 0x4, scoped, tag = 'scoped memory for tile.8']
  %s0 = inlined_call_operand.vmem [shape: f32[8], index: 0, kind: input, shape index: {}]
  %s1 = inlined_call_operand.vmem [shape: f32[16,8], index: 1, kind: output, shape index: {}]
  // Predicated region
  $region2: #{tile.8} parent=0 // pred_check
    _
  $region3: #{tile.8} parent=0 // pred_check_branch
    %3 = sbr.rel (0) target = $region5
  $region4: #{tile.8} parent=0 // pred_region
    _
  $region5: #{tile.8} parent=0 // pred_fallthru
    _
  %v4 = vld [vmem:[%s0] ss:$0 sm:$0xff]
  %5 = vst [vmem:[%s1] sm:$0xff] %v4
  %s6 = scalar_lea.vmem %s1, 8
  %7 = vst [vmem:[%s6] sm:$0xff] %v4

// kernel: tile.9
$region0: #{tile.9}
  %s0 = inlined_call_operand.vmem [shape: f32[16,8], index: 0, kind: input, shape index: {}]
  %s1 = inlined_call_operand.vmem [shape: f32[1,128], index: 1, kind: output, shape index: {}]
  $region1: #{tile.9} parent=0
    #allocation0 [shape = 'u8[4096]{0}', space=vmem, size = 0x1000, scoped, tag = 'scoped mem for output reshape']
    %v2 = vld [vmem:[%s0] sm:$0x1]
    %vm3 = vcmask 64512
    %4 = vst.msk [vmem:[#allocation0] sm:$0x1] %vm3, %v2
    %s5 = scalar_lea.vmem %s0, 15
    %v6 = vld [vmem:[%s5] sm:$0x1]
    %7 = vrot.lane.b32.xlu0 %v6, 120
    %v8 = vpop.permute.xlu0 %7
    %vm9 = vcmask 1048512
    %10 = vst.msk [vmem:[#allocation0] sm:$0x1] %vm9, %v8
    %s11 = scalar_lea.vmem %s0, 14
    %v12 = vld [vmem:[%s11] sm:$0x1]
    %13 = vrot.lane.b32.xlu0 %v12, 112
    %v14 = vpop.permute.xlu0 %13
    %vm15 = vcmask 982912
    %16 = vst.msk [vmem:[#allocation0] sm:$0x1] %vm15, %v14
    %s17 = scalar_lea.vmem %s0, 13
    %v18 = vld [vmem:[%s17] sm:$0x1]
    %19 = vrot.lane.b32.xlu0 %v18, 104
    %v20 = vpop.permute.xlu0 %19
    %vm21 = vcmask 917312
    %22 = vst.msk [vmem:[#allocation0] sm:$0x1] %vm21, %v20
    %s23 = scalar_lea.vmem %s0, 12
    %v24 = vld [vmem:[%s23] sm:$0x1]
    %25 = vrot.lane.b32.xlu0 %v24, 96
    %v26 = vpop.permute.xlu0 %25
    %vm27 = vcmask 851712
    %28 = vst.msk [vmem:[#allocation0] sm:$0x1] %vm27, %v26
    %s29 = scalar_lea.vmem %s0, 11
    %v30 = vld [vmem:[%s29] sm:$0x1]
    %31 = vrot.lane.b32.xlu0 %v30, 88
    %v32 = vpop.permute.xlu0 %31
    %vm33 = vcmask 786112
    %34 = vst.msk [vmem:[#allocation0] sm:$0x1] %vm33, %v32
    %s35 = scalar_lea.vmem %s0, 10
    %v36 = vld [vmem:[%s35] sm:$0x1]
    %37 = vrot.lane.b32.xlu0 %v36, 80
    %v38 = vpop.permute.xlu0 %37
    %vm39 = vcmask 720512
    %40 = vst.msk [vmem:[#allocation0] sm:$0x1] %vm39, %v38
    %s41 = scalar_lea.vmem %s0, 9
    %v42 = vld [vmem:[%s41] sm:$0x1]
    %43 = vrot.lane.b32.xlu0 %v42, 72
    %v44 = vpop.permute.xlu0 %43
    %vm45 = vcmask 654912
    %46 = vst.msk [vmem:[#allocation0] sm:$0x1] %vm45, %v44
    %s47 = scalar_lea.vmem %s0, 8
    %v48 = vld [vmem:[%s47] sm:$0x1]
    %49 = vrot.lane.b32.xlu0 %v48, 64
    %v50 = vpop.permute.xlu0 %49
    %vm51 = vcmask 589312
    %52 = vst.msk [vmem:[#allocation0] sm:$0x1] %vm51, %v50
    %s53 = scalar_lea.vmem %s0, 7
    %v54 = vld [vmem:[%s53] sm:$0x1]
    %55 = vrot.lane.b32.xlu0 %v54, 56
    %v56 = vpop.permute.xlu0 %55
    %vm57 = vcmask 523712
    %58 = vst.msk [vmem:[#allocation0] sm:$0x1] %vm57, %v56
    %s59 = scalar_lea.vmem %s0, 6
    %v60 = vld [vmem:[%s59] sm:$0x1]
    %61 = vrot.lane.b32.xlu0 %v60, 48
    %v62 = vpop.permute.xlu0 %61
    %vm63 = vcmask 458112
    %64 = vst.msk [vmem:[#allocation0] sm:$0x1] %vm63, %v62
    %s65 = scalar_lea.vmem %s0, 5
    %v66 = vld [vmem:[%s65] sm:$0x1]
    %67 = vrot.lane.b32.xlu0 %v66, 40
    %v68 = vpop.permute.xlu0 %67
    %vm69 = vcmask 392512
    %70 = vst.msk [vmem:[#allocation0] sm:$0x1] %vm69, %v68
    %s71 = scalar_lea.vmem %s0, 4
    %v72 = vld [vmem:[%s71] sm:$0x1]
    %73 = vrot.lane.b32.xlu0 %v72, 32
    %v74 = vpop.permute.xlu0 %73
    %vm75 = vcmask 326912
    %76 = vst.msk [vmem:[#allocation0] sm:$0x1] %vm75, %v74
    %s77 = scalar_lea.vmem %s0, 3
    %v78 = vld [vmem:[%s77] sm:$0x1]
    %79 = vrot.lane.b32.xlu0 %v78, 24
    %v80 = vpop.permute.xlu0 %79
    %vm81 = vcmask 261312
    %82 = vst.msk [vmem:[#allocation0] sm:$0x1] %vm81, %v80
    %s83 = scalar_lea.vmem %s0, 2
    %v84 = vld [vmem:[%s83] sm:$0x1]
    %85 = vrot.lane.b32.xlu0 %v84, 16
    %v86 = vpop.permute.xlu0 %85
    %vm87 = vcmask 195712
    %88 = vst.msk [vmem:[#allocation0] sm:$0x1] %vm87, %v86
    %s89 = scalar_lea.vmem %s0, 1
    %v90 = vld [vmem:[%s89] sm:$0x1]
    %91 = vrot.lane.b32.xlu0 %v90, 8
    %v92 = vpop.permute.xlu0 %91
    %vm93 = vcmask 130112
    %94 = vst.msk [vmem:[#allocation0] sm:$0x1] %vm93, %v92
    %s96 = sshll.u32 1, 1
    %s97 = ssub.s32 %s96, 1
    %v99 = vld [vmem:[#allocation0] sm:%s97]
    %s100 = sshll.u32 1, 1
    %s101 = ssub.s32 %s100, 1
    %102 = vst [vmem:[%s1] sm:%s101] %v99

// kernel: quant_fx_forward.1
$region0: #{quant_fx_forward.1}
  #allocation0 [shape = 'u32[]', space=smem, size = 0x4, offset = 0x4, fixed_abs, tag = 'smem constant byte address 0x4 - core index']
  #allocation1 [shape = 'u32[144,128]{1,0:T(1,128)}', space=vmem, size = 0x12000, scoped, tag = 'internal scratch']
  %s0 = inlined_call_operand.vmem [shape: f32[6], index: 0, kind: input, shape index: {}]
  %s1 = inlined_call_operand.vmem [shape: f32[32,576], index: 1, kind: input, shape index: {}]
  %s2 = inlined_call_operand.vmem [shape: f32[576,128], index: 2, kind: input, shape index: {}]
  %s3 = inlined_call_operand.vmem [shape: f32[1,128], index: 3, kind: input, shape index: {}]
  %s4 = inlined_call_operand.vmem [shape: f32[32,128], index: 4, kind: output, shape index: {}]
  %s5 = sld [smem:[#allocation0]]
  $region30: #{quant_fx_forward.1} parent=0
    _
  %s7 = ssub.s32 1, %s5
  %s8 = scalar_select 0, %s7, %s5
  $region1: #{quant_fx_forward.1} parent=0
    #allocation2 [shape = 'u8[512]{0}', space=smem, size = 0x200, scoped, tag = 'input window, operand 0, single buffered']
    #allocation3 [shape = 's32[1]{0}', space=sflag, size = 0x4, scoped, tag = 'scoped memory for quant_fx_forward.1']
    %9 = vsyncpa [#allocation3], 0
    // Predicated region
    $region2: #{quant_fx_forward.1} parent=1 // pred_check
      _
    $region3: #{quant_fx_forward.1} parent=1 // pred_check_branch
      %11 = sbr.rel (0) target = $region5
    $region4: #{quant_fx_forward.1} parent=1 // pred_region
      %s13 = ssub.s32 16, 16
      %14 = vsyncadd [#allocation3], %s13
      %s16 = sshll.u32 %s0, 4
      %s17 = int_to_ptr.vmem [resolvable:$true] %s16
      %19 = dma.vmem_to_smem %s17, 16, [#allocation2], [#allocation3]
    $region5: #{quant_fx_forward.1} parent=1 // pred_fallthru
      _
    // Predicated region
    $region6: #{quant_fx_forward.1} parent=1 // pred_check
      _
    $region7: #{quant_fx_forward.1} parent=1 // pred_check_branch
      %21 = sbr.rel (0) target = $region9
    $region8: #{quant_fx_forward.1} parent=1 // pred_region
      _
    $region9: #{quant_fx_forward.1} parent=1 // pred_fallthru
      _
    // Predicated region
    $region10: #{quant_fx_forward.1} parent=1 // pred_check
      _
    $region11: #{quant_fx_forward.1} parent=1 // pred_check_branch
      %23 = sbr.rel (0) target = $region13
    $region12: #{quant_fx_forward.1} parent=1 // pred_region
      _
    $region13: #{quant_fx_forward.1} parent=1 // pred_fallthru
      _
    // Predicated region
    $region14: #{quant_fx_forward.1} parent=1 // pred_check
      _
    $region15: #{quant_fx_forward.1} parent=1 // pred_check_branch
      %25 = sbr.rel (0) target = $region17
    $region16: #{quant_fx_forward.1} parent=1 // pred_region
      _
    $region17: #{quant_fx_forward.1} parent=1 // pred_fallthru
      _
    // Predicated region
    $region18: #{quant_fx_forward.1} parent=1 // pred_check
      _
    $region19: #{quant_fx_forward.1} parent=1 // pred_check_branch
      %27 = sbr.rel (0) target = $region21
    $region20: #{quant_fx_forward.1} parent=1 // pred_region
      %28 = dma.done [#allocation3], 16
    $region21: #{quant_fx_forward.1} parent=1 // pred_fallthru
      _
    %29 = sfence
    %s31 = sld [smem:[#allocation2]]
    %s32 = sld [smem:[#allocation2 + $0x1]]
    %s33 = sld [smem:[#allocation2 + $0x2]]
    %s34 = sld [smem:[#allocation2 + $0x3]]
    %s35 = sld [smem:[#allocation2 + $0x4]]
    %s36 = sld [smem:[#allocation2 + $0x5]]
    %v37 = vld [vmem:[%s1] sm:$0xff]
    %v38 = vld [vmem:[%s1 + $0x8] sm:$0xff]
    %v39 = vld [vmem:[%s1 + $0x10] sm:$0xff]
    %v40 = vld [vmem:[%s1 + $0x18] sm:$0xff]
    %v41 = vld [vmem:[%s1 + $0x20] sm:$0xff]
    %v42 = vld [vmem:[%s1 + $0x28] sm:$0xff]
    %v43 = vld [vmem:[%s1 + $0x30] sm:$0xff]
    %v44 = vld [vmem:[%s1 + $0x38] sm:$0xff]
    %v45 = vld [vmem:[%s1 + $0x40] sm:$0xff]
    %v46 = vld [vmem:[%s1 + $0x48] sm:$0xff]
    %v47 = vld [vmem:[%s1 + $0x50] sm:$0xff]
    %v48 = vld [vmem:[%s1 + $0x58] sm:$0xff]
    %v49 = vld [vmem:[%s1 + $0x60] sm:$0xff]
    %v50 = vld [vmem:[%s1 + $0x68] sm:$0xff]
    %v51 = vld [vmem:[%s1 + $0x70] sm:$0xff]
    %v52 = vld [vmem:[%s1 + $0x78] sm:$0xff]
    %v53 = vld [vmem:[%s1 + $0x80] sm:$0xff]
    %v54 = vld [vmem:[%s1 + $0x88] sm:$0xff]
    %v55 = vld [vmem:[%s1 + $0x90] sm:$0xff]
    %v56 = vld [vmem:[%s1 + $0x98] sm:$0xff]
    %v57 = vstv %s32
    %v58 = vmul.f32 %v37, %v57
    %v59 = vmul.f32 %v38, %v57
    %v60 = vmul.f32 %v39, %v57
    %v61 = vmul.f32 %v40, %v57
    %v62 = vmul.f32 %v41, %v57
    %v63 = vmul.f32 %v42, %v57
    %v64 = vmul.f32 %v43, %v57
    %v65 = vmul.f32 %v44, %v57
    %v66 = vmul.f32 %v45, %v57
    %v67 = vmul.f32 %v46, %v57
    %v68 = vmul.f32 %v47, %v57
    %v69 = vmul.f32 %v48, %v57
    %v70 = vmul.f32 %v49, %v57
    %v71 = vmul.f32 %v50, %v57
    %v72 = vmul.f32 %v51, %v57
    %v73 = vmul.f32 %v52, %v57
    %v74 = vmul.f32 %v53, %v57
    %v75 = vmul.f32 %v54, %v57
    %v76 = vmul.f32 %v55, %v57
    %v77 = vmul.f32 %v56, %v57
    %v78 = vround.ne.pseudo %v58
    %v79 = vround.ne.pseudo %v59
    %v80 = vround.ne.pseudo %v60
    %v81 = vround.ne.pseudo %v61
    %v82 = vround.ne.pseudo %v62
    %v83 = vround.ne.pseudo %v63
    %v84 = vround.ne.pseudo %v64
    %v85 = vround.ne.pseudo %v65
    %v86 = vround.ne.pseudo %v66
    %v87 = vround.ne.pseudo %v67
    %v88 = vround.ne.pseudo %v68
    %v89 = vround.ne.pseudo %v69
    %v90 = vround.ne.pseudo %v70
    %v91 = vround.ne.pseudo %v71
    %v92 = vround.ne.pseudo %v72
    %v93 = vround.ne.pseudo %v73
    %v94 = vround.ne.pseudo %v74
    %v95 = vround.ne.pseudo %v75
    %v96 = vround.ne.pseudo %v76
    %v97 = vround.ne.pseudo %v77
    %v98 = vstv %s33
    %v99 = vadd.f32 %v78, %v98
    %v100 = vadd.f32 %v79, %v98
    %v101 = vadd.f32 %v80, %v98
    %v102 = vadd.f32 %v81, %v98
    %v103 = vadd.f32 %v82, %v98
    %v104 = vadd.f32 %v83, %v98
    %v105 = vadd.f32 %v84, %v98
    %v106 = vadd.f32 %v85, %v98
    %v107 = vadd.f32 %v86, %v98
    %v108 = vadd.f32 %v87, %v98
    %v109 = vadd.f32 %v88, %v98
    %v110 = vadd.f32 %v89, %v98
    %v111 = vadd.f32 %v90, %v98
    %v112 = vadd.f32 %v91, %v98
    %v113 = vadd.f32 %v92, %v98
    %v114 = vadd.f32 %v93, %v98
    %v115 = vadd.f32 %v94, %v98
    %v116 = vadd.f32 %v95, %v98
    %v117 = vadd.f32 %v96, %v98
    %v118 = vadd.f32 %v97, %v98
    %v119 = vmax.f32 %v99, 0.0
    %v120 = vmax.f32 %v100, 0.0
    %v121 = vmax.f32 %v101, 0.0
    %v122 = vmax.f32 %v102, 0.0
    %v123 = vmax.f32 %v103, 0.0
    %v124 = vmax.f32 %v104, 0.0
    %v125 = vmax.f32 %v105, 0.0
    %v126 = vmax.f32 %v106, 0.0
    %v127 = vmax.f32 %v107, 0.0
    %v128 = vmax.f32 %v108, 0.0
    %v129 = vmax.f32 %v109, 0.0
    %v130 = vmax.f32 %v110, 0.0
    %v131 = vmax.f32 %v111, 0.0
    %v132 = vmax.f32 %v112, 0.0
    %v133 = vmax.f32 %v113, 0.0
    %v134 = vmax.f32 %v114, 0.0
    %v135 = vmax.f32 %v115, 0.0
    %v136 = vmax.f32 %v116, 0.0
    %v137 = vmax.f32 %v117, 0.0
    %v138 = vmax.f32 %v118, 0.0
    %v139 = vmin.f32 %v119, 255.0
    %v140 = vmin.f32 %v120, 255.0
    %v141 = vmin.f32 %v121, 255.0
    %v142 = vmin.f32 %v122, 255.0
    %v143 = vmin.f32 %v123, 255.0
    %v144 = vmin.f32 %v124, 255.0
    %v145 = vmin.f32 %v125, 255.0
    %v146 = vmin.f32 %v126, 255.0
    %v147 = vmin.f32 %v127, 255.0
    %v148 = vmin.f32 %v128, 255.0
    %v149 = vmin.f32 %v129, 255.0
    %v150 = vmin.f32 %v130, 255.0
    %v151 = vmin.f32 %v131, 255.0
    %v152 = vmin.f32 %v132, 255.0
    %v153 = vmin.f32 %v133, 255.0
    %v154 = vmin.f32 %v134, 255.0
    %v155 = vmin.f32 %v135, 255.0
    %v156 = vmin.f32 %v136, 255.0
    %v157 = vmin.f32 %v137, 255.0
    %v158 = vmin.f32 %v138, 255.0
    %v159 = vsub.f32 %v139, %v98
    %v160 = vsub.f32 %v140, %v98
    %v161 = vsub.f32 %v141, %v98
    %v162 = vsub.f32 %v142, %v98
    %v163 = vsub.f32 %v143, %v98
    %v164 = vsub.f32 %v144, %v98
    %v165 = vsub.f32 %v145, %v98
    %v166 = vsub.f32 %v146, %v98
    %v167 = vsub.f32 %v147, %v98
    %v168 = vsub.f32 %v148, %v98
    %v169 = vsub.f32 %v149, %v98
    %v170 = vsub.f32 %v150, %v98
    %v171 = vsub.f32 %v151, %v98
    %v172 = vsub.f32 %v152, %v98
    %v173 = vsub.f32 %v153, %v98
    %v174 = vsub.f32 %v154, %v98
    %v175 = vsub.f32 %v155, %v98
    %v176 = vsub.f32 %v156, %v98
    %v177 = vsub.f32 %v157, %v98
    %v178 = vsub.f32 %v158, %v98
    %v179 = vld [vmem:[%s2] sm:$0xff]
    %v180 = vld [vmem:[%s2 + $0x8] sm:$0xff]
    %v181 = vld [vmem:[%s2 + $0x10] sm:$0xff]
    %v182 = vld [vmem:[%s2 + $0x18] sm:$0xff]
    %v183 = vld [vmem:[%s2 + $0x20] sm:$0xff]
    %v184 = vld [vmem:[%s2 + $0x28] sm:$0xff]
    %v185 = vld [vmem:[%s2 + $0x30] sm:$0xff]
    %v186 = vld [vmem:[%s2 + $0x38] sm:$0xff]
    %v187 = vld [vmem:[%s2 + $0x40] sm:$0xff]
    %v188 = vld [vmem:[%s2 + $0x48] sm:$0xff]
    %v189 = vld [vmem:[%s2 + $0x50] sm:$0xff]
    %v190 = vld [vmem:[%s2 + $0x58] sm:$0xff]
    %v191 = vld [vmem:[%s2 + $0x60] sm:$0xff]
    %v192 = vld [vmem:[%s2 + $0x68] sm:$0xff]
    %v193 = vld [vmem:[%s2 + $0x70] sm:$0xff]
    %v194 = vld [vmem:[%s2 + $0x78] sm:$0xff]
    %v195 = vld [vmem:[%s2 + $0x80] sm:$0xff]
    %v196 = vld [vmem:[%s2 + $0x88] sm:$0xff]
    %v197 = vld [vmem:[%s2 + $0x90] sm:$0xff]
    %v198 = vld [vmem:[%s2 + $0x98] sm:$0xff]
    %v199 = vld [vmem:[%s2 + $0xa0] sm:$0xff]
    %v200 = vld [vmem:[%s2 + $0xa8] sm:$0xff]
    %v201 = vld [vmem:[%s2 + $0xb0] sm:$0xff]
    %v202 = vld [vmem:[%s2 + $0xb8] sm:$0xff]
    %v203 = vld [vmem:[%s2 + $0xc0] sm:$0xff]
    %v204 = vld [vmem:[%s2 + $0xc8] sm:$0xff]
    %v205 = vld [vmem:[%s2 + $0xd0] sm:$0xff]
    %v206 = vld [vmem:[%s2 + $0xd8] sm:$0xff]
    %v207 = vld [vmem:[%s2 + $0xe0] sm:$0xff]
    %v208 = vld [vmem:[%s2 + $0xe8] sm:$0xff]
    %v209 = vld [vmem:[%s2 + $0xf0] sm:$0xff]
    %v210 = vld [vmem:[%s2 + $0xf8] sm:$0xff]
    %v211 = vld [vmem:[%s2 + $0x100] sm:$0xff]
    %v212 = vld [vmem:[%s2 + $0x108] sm:$0xff]
    %v213 = vld [vmem:[%s2 + $0x110] sm:$0xff]
    %v214 = vld [vmem:[%s2 + $0x118] sm:$0xff]
    %v215 = vld [vmem:[%s2 + $0x120] sm:$0xff]
    %v216 = vld [vmem:[%s2 + $0x128] sm:$0xff]
    %v217 = vld [vmem:[%s2 + $0x130] sm:$0xff]
    %v218 = vld [vmem:[%s2 + $0x138] sm:$0xff]
    %v219 = vld [vmem:[%s2 + $0x140] sm:$0xff]
    %v220 = vld [vmem:[%s2 + $0x148] sm:$0xff]
    %v221 = vld [vmem:[%s2 + $0x150] sm:$0xff]
    %v222 = vld [vmem:[%s2 + $0x158] sm:$0xff]
    %v223 = vld [vmem:[%s2 + $0x160] sm:$0xff]
    %v224 = vld [vmem:[%s2 + $0x168] sm:$0xff]
    %v225 = vld [vmem:[%s2 + $0x170] sm:$0xff]
    %v226 = vld [vmem:[%s2 + $0x178] sm:$0xff]
    %v227 = vld [vmem:[%s2 + $0x180] sm:$0xff]
    %v228 = vld [vmem:[%s2 + $0x188] sm:$0xff]
    %v229 = vld [vmem:[%s2 + $0x190] sm:$0xff]
    %v230 = vld [vmem:[%s2 + $0x198] sm:$0xff]
    %v231 = vld [vmem:[%s2 + $0x1a0] sm:$0xff]
    %v232 = vld [vmem:[%s2 + $0x1a8] sm:$0xff]
    %v233 = vld [vmem:[%s2 + $0x1b0] sm:$0xff]
    %v234 = vld [vmem:[%s2 + $0x1b8] sm:$0xff]
    %v235 = vld [vmem:[%s2 + $0x1c0] sm:$0xff]
    %v236 = vld [vmem:[%s2 + $0x1c8] sm:$0xff]
    %v237 = vld [vmem:[%s2 + $0x1d0] sm:$0xff]
    %v238 = vld [vmem:[%s2 + $0x1d8] sm:$0xff]
    %v239 = vld [vmem:[%s2 + $0x1e0] sm:$0xff]
    %v240 = vld [vmem:[%s2 + $0x1e8] sm:$0xff]
    %v241 = vld [vmem:[%s2 + $0x1f0] sm:$0xff]
    %v242 = vld [vmem:[%s2 + $0x1f8] sm:$0xff]
    %v243 = vld [vmem:[%s2 + $0x200] sm:$0xff]
    %v244 = vld [vmem:[%s2 + $0x208] sm:$0xff]
    %v245 = vld [vmem:[%s2 + $0x210] sm:$0xff]
    %v246 = vld [vmem:[%s2 + $0x218] sm:$0xff]
    %v247 = vld [vmem:[%s2 + $0x220] sm:$0xff]
    %v248 = vld [vmem:[%s2 + $0x228] sm:$0xff]
    %v249 = vld [vmem:[%s2 + $0x230] sm:$0xff]
    %v250 = vld [vmem:[%s2 + $0x238] sm:$0xff]
    %v251 = vld [vmem:[%s3] sm:$0x1]
    %v253 = vlaneseq
    %v254 = vshrl.u32 %v253, 7
    %v255 = vsub.s32 0, %v254
    %v256 = vrot.slane %v251, %v255
    %v258 = vrcp.pop %v256
    %v259 = vmul.f32 %v179, %v258
    %v260 = vmul.f32 %v180, %v258
    %v261 = vmul.f32 %v181, %v258
    %v262 = vmul.f32 %v182, %v258
    %v263 = vmul.f32 %v183, %v258
    %v264 = vmul.f32 %v184, %v258
    %v265 = vmul.f32 %v185, %v258
    %v266 = vmul.f32 %v186, %v258
    %v267 = vmul.f32 %v187, %v258
    %v268 = vmul.f32 %v188, %v258
    %v269 = vmul.f32 %v189, %v258
    %v270 = vmul.f32 %v190, %v258
    %v271 = vmul.f32 %v191, %v258
    %v272 = vmul.f32 %v192, %v258
    %v273 = vmul.f32 %v193, %v258
    %v274 = vmul.f32 %v194, %v258
    %v275 = vmul.f32 %v195, %v258
    %v276 = vmul.f32 %v196, %v258
    %v277 = vmul.f32 %v197, %v258
    %v278 = vmul.f32 %v198, %v258
    %v279 = vmul.f32 %v199, %v258
    %v280 = vmul.f32 %v200, %v258
    %v281 = vmul.f32 %v201, %v258
    %v282 = vmul.f32 %v202, %v258
    %v283 = vmul.f32 %v203, %v258
    %v284 = vmul.f32 %v204, %v258
    %v285 = vmul.f32 %v205, %v258
    %v286 = vmul.f32 %v206, %v258
    %v287 = vmul.f32 %v207, %v258
    %v288 = vmul.f32 %v208, %v258
    %v289 = vmul.f32 %v209, %v258
    %v290 = vmul.f32 %v210, %v258
    %v291 = vmul.f32 %v211, %v258
    %v292 = vmul.f32 %v212, %v258
    %v293 = vmul.f32 %v213, %v258
    %v294 = vmul.f32 %v214, %v258
    %v295 = vmul.f32 %v215, %v258
    %v296 = vmul.f32 %v216, %v258
    %v297 = vmul.f32 %v217, %v258
    %v298 = vmul.f32 %v218, %v258
    %v299 = vmul.f32 %v219, %v258
    %v300 = vmul.f32 %v220, %v258
    %v301 = vmul.f32 %v221, %v258
    %v302 = vmul.f32 %v222, %v258
    %v303 = vmul.f32 %v223, %v258
    %v304 = vmul.f32 %v224, %v258
    %v305 = vmul.f32 %v225, %v258
    %v306 = vmul.f32 %v226, %v258
    %v307 = vmul.f32 %v227, %v258
    %v308 = vmul.f32 %v228, %v258
    %v309 = vmul.f32 %v229, %v258
    %v310 = vmul.f32 %v230, %v258
    %v311 = vmul.f32 %v231, %v258
    %v312 = vmul.f32 %v232, %v258
    %v313 = vmul.f32 %v233, %v258
    %v314 = vmul.f32 %v234, %v258
    %v315 = vmul.f32 %v235, %v258
    %v316 = vmul.f32 %v236, %v258
    %v317 = vmul.f32 %v237, %v258
    %v318 = vmul.f32 %v238, %v258
    %v319 = vmul.f32 %v239, %v258
    %v320 = vmul.f32 %v240, %v258
    %v321 = vmul.f32 %v241, %v258
    %v322 = vmul.f32 %v242, %v258
    %v323 = vmul.f32 %v243, %v258
    %v324 = vmul.f32 %v244, %v258
    %v325 = vmul.f32 %v245, %v258
    %v326 = vmul.f32 %v246, %v258
    %v327 = vmul.f32 %v247, %v258
    %v328 = vmul.f32 %v248, %v258
    %v329 = vmul.f32 %v249, %v258
    %v330 = vmul.f32 %v250, %v258
    %v331 = vround.ne.pseudo %v259
    %v332 = vround.ne.pseudo %v260
    %v333 = vround.ne.pseudo %v261
    %v334 = vround.ne.pseudo %v262
    %v335 = vround.ne.pseudo %v263
    %v336 = vround.ne.pseudo %v264
    %v337 = vround.ne.pseudo %v265
    %v338 = vround.ne.pseudo %v266
    %v339 = vround.ne.pseudo %v267
    %v340 = vround.ne.pseudo %v268
    %v341 = vround.ne.pseudo %v269
    %v342 = vround.ne.pseudo %v270
    %v343 = vround.ne.pseudo %v271
    %v344 = vround.ne.pseudo %v272
    %v345 = vround.ne.pseudo %v273
    %v346 = vround.ne.pseudo %v274
    %v347 = vround.ne.pseudo %v275
    %v348 = vround.ne.pseudo %v276
    %v349 = vround.ne.pseudo %v277
    %v350 = vround.ne.pseudo %v278
    %v351 = vround.ne.pseudo %v279
    %v352 = vround.ne.pseudo %v280
    %v353 = vround.ne.pseudo %v281
    %v354 = vround.ne.pseudo %v282
    %v355 = vround.ne.pseudo %v283
    %v356 = vround.ne.pseudo %v284
    %v357 = vround.ne.pseudo %v285
    %v358 = vround.ne.pseudo %v286
    %v359 = vround.ne.pseudo %v287
    %v360 = vround.ne.pseudo %v288
    %v361 = vround.ne.pseudo %v289
    %v362 = vround.ne.pseudo %v290
    %v363 = vround.ne.pseudo %v291
    %v364 = vround.ne.pseudo %v292
    %v365 = vround.ne.pseudo %v293
    %v366 = vround.ne.pseudo %v294
    %v367 = vround.ne.pseudo %v295
    %v368 = vround.ne.pseudo %v296
    %v369 = vround.ne.pseudo %v297
    %v370 = vround.ne.pseudo %v298
    %v371 = vround.ne.pseudo %v299
    %v372 = vround.ne.pseudo %v300
    %v373 = vround.ne.pseudo %v301
    %v374 = vround.ne.pseudo %v302
    %v375 = vround.ne.pseudo %v303
    %v376 = vround.ne.pseudo %v304
    %v377 = vround.ne.pseudo %v305
    %v378 = vround.ne.pseudo %v306
    %v379 = vround.ne.pseudo %v307
    %v380 = vround.ne.pseudo %v308
    %v381 = vround.ne.pseudo %v309
    %v382 = vround.ne.pseudo %v310
    %v383 = vround.ne.pseudo %v311
    %v384 = vround.ne.pseudo %v312
    %v385 = vround.ne.pseudo %v313
    %v386 = vround.ne.pseudo %v314
    %v387 = vround.ne.pseudo %v315
    %v388 = vround.ne.pseudo %v316
    %v389 = vround.ne.pseudo %v317
    %v390 = vround.ne.pseudo %v318
    %v391 = vround.ne.pseudo %v319
    %v392 = vround.ne.pseudo %v320
    %v393 = vround.ne.pseudo %v321
    %v394 = vround.ne.pseudo %v322
    %v395 = vround.ne.pseudo %v323
    %v396 = vround.ne.pseudo %v324
    %v397 = vround.ne.pseudo %v325
    %v398 = vround.ne.pseudo %v326
    %v399 = vround.ne.pseudo %v327
    %v400 = vround.ne.pseudo %v328
    %v401 = vround.ne.pseudo %v329
    %v402 = vround.ne.pseudo %v330
    %v403 = vmax.f32 %v331, -128.0
    %v404 = vmax.f32 %v332, -128.0
    %v405 = vmax.f32 %v333, -128.0
    %v406 = vmax.f32 %v334, -128.0
    %v407 = vmax.f32 %v335, -128.0
    %v408 = vmax.f32 %v336, -128.0
    %v409 = vmax.f32 %v337, -128.0
    %v410 = vmax.f32 %v338, -128.0
    %v411 = vmax.f32 %v339, -128.0
    %v412 = vmax.f32 %v340, -128.0
    %v413 = vmax.f32 %v341, -128.0
    %v414 = vmax.f32 %v342, -128.0
    %v415 = vmax.f32 %v343, -128.0
    %v416 = vmax.f32 %v344, -128.0
    %v417 = vmax.f32 %v345, -128.0
    %v418 = vmax.f32 %v346, -128.0
    %v419 = vmax.f32 %v347, -128.0
    %v420 = vmax.f32 %v348, -128.0
    %v421 = vmax.f32 %v349, -128.0
    %v422 = vmax.f32 %v350, -128.0
    %v423 = vmax.f32 %v351, -128.0
    %v424 = vmax.f32 %v352, -128.0
    %v425 = vmax.f32 %v353, -128.0
    %v426 = vmax.f32 %v354, -128.0
    %v427 = vmax.f32 %v355, -128.0
    %v428 = vmax.f32 %v356, -128.0
    %v429 = vmax.f32 %v357, -128.0
    %v430 = vmax.f32 %v358, -128.0
    %v431 = vmax.f32 %v359, -128.0
    %v432 = vmax.f32 %v360, -128.0
    %v433 = vmax.f32 %v361, -128.0
    %v434 = vmax.f32 %v362, -128.0
    %v435 = vmax.f32 %v363, -128.0
    %v436 = vmax.f32 %v364, -128.0
    %v437 = vmax.f32 %v365, -128.0
    %v438 = vmax.f32 %v366, -128.0
    %v439 = vmax.f32 %v367, -128.0
    %v440 = vmax.f32 %v368, -128.0
    %v441 = vmax.f32 %v369, -128.0
    %v442 = vmax.f32 %v370, -128.0
    %v443 = vmax.f32 %v371, -128.0
    %v444 = vmax.f32 %v372, -128.0
    %v445 = vmax.f32 %v373, -128.0
    %v446 = vmax.f32 %v374, -128.0
    %v447 = vmax.f32 %v375, -128.0
    %v448 = vmax.f32 %v376, -128.0
    %v449 = vmax.f32 %v377, -128.0
    %v450 = vmax.f32 %v378, -128.0
    %v451 = vmax.f32 %v379, -128.0
    %v452 = vmax.f32 %v380, -128.0
    %v453 = vmax.f32 %v381, -128.0
    %v454 = vmax.f32 %v382, -128.0
    %v455 = vmax.f32 %v383, -128.0
    %v456 = vmax.f32 %v384, -128.0
    %v457 = vmax.f32 %v385, -128.0
    %v458 = vmax.f32 %v386, -128.0
    %v459 = vmax.f32 %v387, -128.0
    %v460 = vmax.f32 %v388, -128.0
    %v461 = vmax.f32 %v389, -128.0
    %v462 = vmax.f32 %v390, -128.0
    %v463 = vmax.f32 %v391, -128.0
    %v464 = vmax.f32 %v392, -128.0
    %v465 = vmax.f32 %v393, -128.0
    %v466 = vmax.f32 %v394, -128.0
    %v467 = vmax.f32 %v395, -128.0
    %v468 = vmax.f32 %v396, -128.0
    %v469 = vmax.f32 %v397, -128.0
    %v470 = vmax.f32 %v398, -128.0
    %v471 = vmax.f32 %v399, -128.0
    %v472 = vmax.f32 %v400, -128.0
    %v473 = vmax.f32 %v401, -128.0
    %v474 = vmax.f32 %v402, -128.0
    %v475 = vmin.f32 %v403, 127.0
    %v476 = vmin.f32 %v404, 127.0
    %v477 = vmin.f32 %v405, 127.0
    %v478 = vmin.f32 %v406, 127.0
    %v479 = vmin.f32 %v407, 127.0
    %v480 = vmin.f32 %v408, 127.0
    %v481 = vmin.f32 %v409, 127.0
    %v482 = vmin.f32 %v410, 127.0
    %v483 = vmin.f32 %v411, 127.0
    %v484 = vmin.f32 %v412, 127.0
    %v485 = vmin.f32 %v413, 127.0
    %v486 = vmin.f32 %v414, 127.0
    %v487 = vmin.f32 %v415, 127.0
    %v488 = vmin.f32 %v416, 127.0
    %v489 = vmin.f32 %v417, 127.0
    %v490 = vmin.f32 %v418, 127.0
    %v491 = vmin.f32 %v419, 127.0
    %v492 = vmin.f32 %v420, 127.0
    %v493 = vmin.f32 %v421, 127.0
    %v494 = vmin.f32 %v422, 127.0
    %v495 = vmin.f32 %v423, 127.0
    %v496 = vmin.f32 %v424, 127.0
    %v497 = vmin.f32 %v425, 127.0
    %v498 = vmin.f32 %v426, 127.0
    %v499 = vmin.f32 %v427, 127.0
    %v500 = vmin.f32 %v428, 127.0
    %v501 = vmin.f32 %v429, 127.0
    %v502 = vmin.f32 %v430, 127.0
    %v503 = vmin.f32 %v431, 127.0
    %v504 = vmin.f32 %v432, 127.0
    %v505 = vmin.f32 %v433, 127.0
    %v506 = vmin.f32 %v434, 127.0
    %v507 = vmin.f32 %v435, 127.0
    %v508 = vmin.f32 %v436, 127.0
    %v509 = vmin.f32 %v437, 127.0
    %v510 = vmin.f32 %v438, 127.0
    %v511 = vmin.f32 %v439, 127.0
    %v512 = vmin.f32 %v440, 127.0
    %v513 = vmin.f32 %v441, 127.0
    %v514 = vmin.f32 %v442, 127.0
    %v515 = vmin.f32 %v443, 127.0
    %v516 = vmin.f32 %v444, 127.0
    %v517 = vmin.f32 %v445, 127.0
    %v518 = vmin.f32 %v446, 127.0
    %v519 = vmin.f32 %v447, 127.0
    %v520 = vmin.f32 %v448, 127.0
    %v521 = vmin.f32 %v449, 127.0
    %v522 = vmin.f32 %v450, 127.0
    %v523 = vmin.f32 %v451, 127.0
    %v524 = vmin.f32 %v452, 127.0
    %v525 = vmin.f32 %v453, 127.0
    %v526 = vmin.f32 %v454, 127.0
    %v527 = vmin.f32 %v455, 127.0
    %v528 = vmin.f32 %v456, 127.0
    %v529 = vmin.f32 %v457, 127.0
    %v530 = vmin.f32 %v458, 127.0
    %v531 = vmin.f32 %v459, 127.0
    %v532 = vmin.f32 %v460, 127.0
    %v533 = vmin.f32 %v461, 127.0
    %v534 = vmin.f32 %v462, 127.0
    %v535 = vmin.f32 %v463, 127.0
    %v536 = vmin.f32 %v464, 127.0
    %v537 = vmin.f32 %v465, 127.0
    %v538 = vmin.f32 %v466, 127.0
    %v539 = vmin.f32 %v467, 127.0
    %v540 = vmin.f32 %v468, 127.0
    %v541 = vmin.f32 %v469, 127.0
    %v542 = vmin.f32 %v470, 127.0
    %v543 = vmin.f32 %v471, 127.0
    %v544 = vmin.f32 %v472, 127.0
    %v545 = vmin.f32 %v473, 127.0
    %v546 = vmin.f32 %v474, 127.0
    %v547 = vpack.c.bf16 %v164, %v159
    %v548 = vpack.c.bf16 %v165, %v160
    %v549 = vpack.c.bf16 %v166, %v161
    %v550 = vpack.c.bf16 %v167, %v162
    %v551 = vpack.c.bf16 %v168, %v163
    %v552 = vpack.c.bf16 %v174, %v169
    %v553 = vpack.c.bf16 %v175, %v170
    %v554 = vpack.c.bf16 %v176, %v171
    %v555 = vpack.c.bf16 %v177, %v172
    %v556 = vpack.c.bf16 %v178, %v173
    %v557 = vpack.c.bf16 %v476, %v475
    %v558 = vpack.c.bf16 %v478, %v477
    %v559 = vpack.c.bf16 %v480, %v479
    %v560 = vpack.c.bf16 %v482, %v481
    %v561 = vpack.c.bf16 %v484, %v483
    %v562 = vpack.c.bf16 %v486, %v485
    %v563 = vpack.c.bf16 %v488, %v487
    %v564 = vpack.c.bf16 %v490, %v489
    %v565 = vpack.c.bf16 %v492, %v491
    %v566 = vpack.c.bf16 %v494, %v493
    %v567 = vpack.c.bf16 %v496, %v495
    %v568 = vpack.c.bf16 %v498, %v497
    %v569 = vpack.c.bf16 %v500, %v499
    %v570 = vpack.c.bf16 %v502, %v501
    %v571 = vpack.c.bf16 %v504, %v503
    %v572 = vpack.c.bf16 %v506, %v505
    %v573 = vpack.c.bf16 %v508, %v507
    %v574 = vpack.c.bf16 %v510, %v509
    %v575 = vpack.c.bf16 %v512, %v511
    %v576 = vpack.c.bf16 %v514, %v513
    %v577 = vpack.c.bf16 %v516, %v515
    %v578 = vpack.c.bf16 %v518, %v517
    %v579 = vpack.c.bf16 %v520, %v519
    %v580 = vpack.c.bf16 %v522, %v521
    %v581 = vpack.c.bf16 %v524, %v523
    %v582 = vpack.c.bf16 %v526, %v525
    %v583 = vpack.c.bf16 %v528, %v527
    %v584 = vpack.c.bf16 %v530, %v529
    %v585 = vpack.c.bf16 %v532, %v531
    %v586 = vpack.c.bf16 %v534, %v533
    %v587 = vpack.c.bf16 %v536, %v535
    %v588 = vpack.c.bf16 %v538, %v537
    %v589 = vpack.c.bf16 %v540, %v539
    %v590 = vpack.c.bf16 %v542, %v541
    %v591 = vpack.c.bf16 %v544, %v543
    %v592 = vpack.c.bf16 %v546, %v545
    %vm593 = vcmask 523264
    %v595 = vsel %vm593, %v551, 0
    %v598 = vsel %vm593, %v556, 0
    %600 = vmatprep.subr.bf16.mxu0 0
    %601 = vmatpush1.bf16.msra.mxu0 %v564
    %602 = vmatprep.subr.bf16.mxu0 0
    %603 = vmatpush1.bf16.msra.mxu0 %v563
    %604 = vmatprep.subr.bf16.mxu0 0
    %605 = vmatpush1.bf16.msra.mxu0 %v562
    %606 = vmatprep.subr.bf16.mxu0 0
    %607 = vmatpush1.bf16.msra.mxu0 %v561
    %608 = vmatprep.subr.bf16.mxu0 0
    %609 = vmatpush1.bf16.msra.mxu0 %v560
    %610 = vmatprep.subr.bf16.mxu0 0
    %611 = vmatpush1.bf16.msra.mxu0 %v559
    %612 = vmatprep.subr.bf16.mxu0 0
    %613 = vmatpush1.bf16.msra.mxu0 %v558
    %614 = vmatprep.subr.bf16.mxu0 0
    %615 = vmatpush1.bf16.msra.mxu0 %v557
    %616 = vmatprep.subr.bf16.mxu0 0
    %617 = vmatpush2.bf16.msra.mxu0 %v572
    %618 = vmatprep.subr.bf16.mxu0 0
    %619 = vmatpush2.bf16.msra.mxu0 %v571
    %620 = vmatprep.subr.bf16.mxu0 0
    %621 = vmatpush2.bf16.msra.mxu0 %v570
    %622 = vmatprep.subr.bf16.mxu0 0
    %623 = vmatpush2.bf16.msra.mxu0 %v569
    %624 = vmatprep.subr.bf16.mxu0 0
    %625 = vmatpush2.bf16.msra.mxu0 %v568
    %626 = vmatprep.subr.bf16.mxu0 0
    %627 = vmatpush2.bf16.msra.mxu0 %v567
    %628 = vmatprep.subr.bf16.mxu0 0
    %629 = vmatpush2.bf16.msra.mxu0 %v566
    %630 = vmatprep.subr.bf16.mxu0 0
    %631 = vmatpush2.bf16.msra.mxu0 %v565
    %632 = vmatprep.mubr.bf16.mxu0 %v548
    %633 = vmatmul.mubr.bf16.gmra.mxu0 %v547
    %v634 = vpop.f32.mrf.mxu0
    %v635 = vadd.f32 0.0, %v634
    %v636 = vpop.f32.mrf.mxu0
    %v637 = vpop.f32.mrf.mxu0
    %v638 = vadd.f32 0.0, %v637
    %v639 = vpop.f32.mrf.mxu0
    %640 = vmatprep.mubr.bf16.mxu0 %v553
    %641 = vmatmul.mubr.bf16.gmra.mxu0 %v552
    %v642 = vpop.f32.mrf.mxu0
    %v643 = vadd.f32 0.0, %v642
    %v644 = vpop.f32.mrf.mxu0
    %v645 = vpop.f32.mrf.mxu0
    %v646 = vadd.f32 0.0, %v645
    %v647 = vpop.f32.mrf.mxu0
    %648 = vdwg.mxu0
    %649 = vmatprep.subr.bf16.mxu0 0
    %650 = vmatpush1.bf16.msra.mxu0 %v580
    %651 = vmatprep.subr.bf16.mxu0 0
    %652 = vmatpush1.bf16.msra.mxu0 %v579
    %653 = vmatprep.subr.bf16.mxu0 0
    %654 = vmatpush1.bf16.msra.mxu0 %v578
    %655 = vmatprep.subr.bf16.mxu0 0
    %656 = vmatpush1.bf16.msra.mxu0 %v577
    %657 = vmatprep.subr.bf16.mxu0 0
    %658 = vmatpush1.bf16.msra.mxu0 %v576
    %659 = vmatprep.subr.bf16.mxu0 0
    %660 = vmatpush1.bf16.msra.mxu0 %v575
    %661 = vmatprep.subr.bf16.mxu0 0
    %662 = vmatpush1.bf16.msra.mxu0 %v574
    %663 = vmatprep.subr.bf16.mxu0 0
    %664 = vmatpush1.bf16.msra.mxu0 %v573
    %665 = vmatprep.subr.bf16.mxu0 0
    %666 = vmatpush2.bf16.msra.mxu0 %v588
    %667 = vmatprep.subr.bf16.mxu0 0
    %668 = vmatpush2.bf16.msra.mxu0 %v587
    %669 = vmatprep.subr.bf16.mxu0 0
    %670 = vmatpush2.bf16.msra.mxu0 %v586
    %671 = vmatprep.subr.bf16.mxu0 0
    %672 = vmatpush2.bf16.msra.mxu0 %v585
    %673 = vmatprep.subr.bf16.mxu0 0
    %674 = vmatpush2.bf16.msra.mxu0 %v584
    %675 = vmatprep.subr.bf16.mxu0 0
    %676 = vmatpush2.bf16.msra.mxu0 %v583
    %677 = vmatprep.subr.bf16.mxu0 0
    %678 = vmatpush2.bf16.msra.mxu0 %v582
    %679 = vmatprep.subr.bf16.mxu0 0
    %680 = vmatpush2.bf16.msra.mxu0 %v581
    %681 = vmatprep.mubr.bf16.mxu0 %v550
    %682 = vmatmul.mubr.bf16.gmra.mxu0 %v549
    %v683 = vpop.f32.mrf.mxu0
    %v684 = vadd.f32 %v635, %v683
    %v685 = vpop.f32.mrf.mxu0
    %v686 = vpop.f32.mrf.mxu0
    %v687 = vadd.f32 %v638, %v686
    %v688 = vpop.f32.mrf.mxu0
    %689 = vmatprep.mubr.bf16.mxu0 %v555
    %690 = vmatmul.mubr.bf16.gmra.mxu0 %v554
    %v691 = vpop.f32.mrf.mxu0
    %v692 = vadd.f32 %v643, %v691
    %v693 = vpop.f32.mrf.mxu0
    %v694 = vpop.f32.mrf.mxu0
    %v695 = vadd.f32 %v646, %v694
    %v696 = vpop.f32.mrf.mxu0
    %697 = vdwg.mxu0
    %698 = vmatprep.subr.bf16.mxu0 0
    %699 = vmatpush1.bf16.msra.mxu0 0
    %700 = vmatprep.subr.bf16.mxu0 0
    %701 = vmatpush1.bf16.msra.mxu0 0
    %702 = vmatprep.subr.bf16.mxu0 0
    %703 = vmatpush1.bf16.msra.mxu0 0
    %704 = vmatprep.subr.bf16.mxu0 0
    %705 = vmatpush1.bf16.msra.mxu0 0
    %706 = vmatprep.subr.bf16.mxu0 0
    %707 = vmatpush1.bf16.msra.mxu0 %v592
    %708 = vmatprep.subr.bf16.mxu0 0
    %709 = vmatpush1.bf16.msra.mxu0 %v591
    %710 = vmatprep.subr.bf16.mxu0 0
    %711 = vmatpush1.bf16.msra.mxu0 %v590
    %712 = vmatprep.subr.bf16.mxu0 0
    %713 = vmatpush1.bf16.msra.mxu0 %v589
    %714 = vmatprep.subr.bf16.mxu0 0
    %715 = vmatpush2.bf16.msra.mxu0 0
    %716 = vmatprep.subr.bf16.mxu0 0
    %717 = vmatpush2.bf16.msra.mxu0 0
    %718 = vmatprep.subr.bf16.mxu0 0
    %719 = vmatpush2.bf16.msra.mxu0 0
    %720 = vmatprep.subr.bf16.mxu0 0
    %721 = vmatpush2.bf16.msra.mxu0 0
    %722 = vmatprep.subr.bf16.mxu0 0
    %723 = vmatpush2.bf16.msra.mxu0 0
    %724 = vmatprep.subr.bf16.mxu0 0
    %725 = vmatpush2.bf16.msra.mxu0 0
    %726 = vmatprep.subr.bf16.mxu0 0
    %727 = vmatpush2.bf16.msra.mxu0 0
    %728 = vmatprep.subr.bf16.mxu0 0
    %729 = vmatpush2.bf16.msra.mxu0 0
    %730 = vmatprep.mubr.bf16.mxu0 0
    %731 = vmatmul.mubr.bf16.gmra.mxu0 %v595
    %v732 = vpop.f32.mrf.mxu0
    %v733 = vadd.f32 %v684, %v732
    %v734 = vpop.f32.mrf.mxu0
    %v735 = vpop.f32.mrf.mxu0
    %v736 = vadd.f32 %v687, %v735
    %v737 = vpop.f32.mrf.mxu0
    %738 = vmatprep.mubr.bf16.mxu0 0
    %739 = vmatmul.mubr.bf16.gmra.mxu0 %v598
    %v740 = vpop.f32.mrf.mxu0
    %v741 = vadd.f32 %v692, %v740
    %v742 = vpop.f32.mrf.mxu0
    %v743 = vpop.f32.mrf.mxu0
    %v744 = vadd.f32 %v695, %v743
    %v745 = vpop.f32.mrf.mxu0
    %746 = vdwg.mxu0
    %v747 = vstv %s31
    %v748 = vmul.f32 %v747, %v251
    %v750 = vlaneseq
    %v751 = vshrl.u32 %v750, 7
    %v752 = vsub.s32 0, %v751
    %v753 = vrot.slane %v748, %v752
    %v755 = vmul.f32 %v733, %v753
    %v756 = vmul.f32 %v736, %v753
    %v757 = vmul.f32 %v741, %v753
    %v758 = vmul.f32 %v744, %v753
    %v759 = vstv %s35
    %v760 = vmul.f32 %v755, %v759
    %v761 = vmul.f32 %v756, %v759
    %v762 = vmul.f32 %v757, %v759
    %v763 = vmul.f32 %v758, %v759
    %v764 = vround.ne.pseudo %v760
    %v765 = vround.ne.pseudo %v761
    %v766 = vround.ne.pseudo %v762
    %v767 = vround.ne.pseudo %v763
    %v768 = vstv %s36
    %v769 = vadd.f32 %v764, %v768
    %v770 = vadd.f32 %v765, %v768
    %v771 = vadd.f32 %v766, %v768
    %v772 = vadd.f32 %v767, %v768
    %v773 = vmax.f32 %v769, 0.0
    %v774 = vmax.f32 %v770, 0.0
    %v775 = vmax.f32 %v771, 0.0
    %v776 = vmax.f32 %v772, 0.0
    %v777 = vmin.f32 %v773, 255.0
    %v778 = vmin.f32 %v774, 255.0
    %v779 = vmin.f32 %v775, 255.0
    %v780 = vmin.f32 %v776, 255.0
    %v781 = vsub.f32 %v777, %v768
    %v782 = vsub.f32 %v778, %v768
    %v783 = vsub.f32 %v779, %v768
    %v784 = vsub.f32 %v780, %v768
    %v785 = vstv %s34
    %v786 = vmul.f32 %v781, %v785
    %v787 = vmul.f32 %v782, %v785
    %v788 = vmul.f32 %v783, %v785
    %v789 = vmul.f32 %v784, %v785
    %790 = vst [vmem:[%s4] sm:$0xff] %v786
    %791 = vst [vmem:[%s4 + $0x8] sm:$0xff] %v787
    %792 = vst [vmem:[%s4 + $0x10] sm:$0xff] %v788
    %793 = vst [vmem:[%s4 + $0x18] sm:$0xff] %v789
    // Predicated region
    $region22: #{quant_fx_forward.1} parent=1 // pred_check
      _
    $region23: #{quant_fx_forward.1} parent=1 // pred_check_branch
      %795 = sbr.rel (0) target = $region25
    $region24: #{quant_fx_forward.1} parent=1 // pred_region
      _
    $region25: #{quant_fx_forward.1} parent=1 // pred_fallthru
      _
    // Predicated region
    $region26: #{quant_fx_forward.1} parent=1 // pred_check
      _
    $region27: #{quant_fx_forward.1} parent=1 // pred_check_branch
      %797 = sbr.rel (0) target = $region29
    $region28: #{quant_fx_forward.1} parent=1 // pred_region
      _
    $region29: #{quant_fx_forward.1} parent=1 // pred_fallthru
      _
    %798 = vsyncpa [#allocation3], 1

</llo_original>
